<compile_context>
chip_gen: v7x
topology: tpu7x:2x2x1
jax: 0.10.0
libtpu: 0.0.40
codegen_flags: <defaults>
</compile_context>

<pallas_src>
import functools

import jax
import jax.numpy as jnp
from jax.experimental import pallas as pl
from jax.experimental.pallas import tpu as pltpu

_BN_EPS = 1e-5
_LANE = 128


# ----------------------------- Pallas kernels ------------------------------

def _linear_kernel(x_ref, w_ref, b_ref, o_ref, acc_ref):
    # x_ref: (B, tk) bf16, w_ref: (tk, tn) bf16 [pre-transposed (F, N) layout],
    # b_ref: (1, tn) f32, o_ref: (B, tn), acc_ref: (B, tn) f32 scratch.
    k = pl.program_id(1)

    @pl.when(k == 0)
    def _():
        acc_ref[...] = jnp.zeros_like(acc_ref)

    acc_ref[...] += jnp.dot(x_ref[...], w_ref[...],
                            preferred_element_type=jnp.float32)

    @pl.when(k == pl.num_programs(1) - 1)
    def _():
        o_ref[...] = (acc_ref[...] + b_ref[...]).astype(o_ref.dtype)


def _linear_bn_kernel(x_ref, w_ref, g_ref, beta_ref, o_ref, acc_ref):
    # Fused Linear + training-mode BatchNorm1d over the batch axis.
    # The linear bias is omitted: it cancels exactly in the batch centering.
    # Exact because the full batch B is resident in each (B, tn) tile.
    k = pl.program_id(1)

    @pl.when(k == 0)
    def _():
        acc_ref[...] = jnp.zeros_like(acc_ref)

    acc_ref[...] += jnp.dot(x_ref[...], w_ref[...],
                            preferred_element_type=jnp.float32)

    @pl.when(k == pl.num_programs(1) - 1)
    def _():
        y = acc_ref[...]                                     # f32
        mean = jnp.mean(y, axis=0, keepdims=True)
        centered = y - mean                                  # reused once
        var = jnp.mean(centered * centered, axis=0, keepdims=True)
        # gamma folded into the inverse std (1xN work), rsqrt on the EUP.
        scale = g_ref[...] * jax.lax.rsqrt(var + _BN_EPS)
        o_ref[...] = (centered * scale + beta_ref[...]).astype(o_ref.dtype)


# ------------------------------ tile selection ------------------------------

def _round_up(x, m):
    return ((x + m - 1) // m) * m


def _tensorcores_per_chip():
    # v7x has 2 TensorCores per chip; v5e/v6e have 1. Gate the N-split on this
    # so 1-TC chips are not charged extra grid-step overhead for nothing.
    try:
        kind = jax.devices()[0].device_kind.lower()
    except Exception:
        return 1
    return 2 if "v7" in kind else 1


def _pick_tn(n_pad):
    # n_pad is always a multiple of 128 (or <= 128 and equal to full N).
    if n_pad <= _LANE:
        return n_pad
    if _tensorcores_per_chip() >= 2:
        # v7x: guarantee >= 2 "parallel" N steps so both TCs get work.
        if n_pad % 256 == 0 and n_pad // 256 >= 2:
            return 256
        if n_pad % _LANE == 0:
            return _LANE
        return n_pad
    # Single-TC chips (v5e/v6e): the biggest dividing tile (fewest grid steps).
    for tn in (512, 256, _LANE):
        if n_pad % tn == 0:
            return tn
    return n_pad


def _pick_tk(f):
    # Whole-F when small; otherwise K-tile so VMEM stays bounded and the weight
    # DMA pipelines under the MXU. Must divide F exactly (F is not padded).
    if f <= 1024:
        return f
    for tk in (1024, 512, 256, _LANE):
        if f % tk == 0:
            return tk
    return f


# ------------------------------ JAX wrappers --------------------------------

def _feat_bottleneck_pallas(x, w_fn, b, gamma, beta, *, fuse_bn, compute_dtype):
    B, F = x.shape
    F2, N = w_fn.shape
    assert F2 == F

    # Lane-dense output stores: pad N up to a multiple of 128, slice after.
    n_pad = N if N % _LANE == 0 else _round_up(N, _LANE)
    if n_pad != N:
        pad = n_pad - N
        w_fn = jnp.pad(w_fn, ((0, 0), (0, pad)))
        b = jnp.pad(b, (0, pad))
        gamma = jnp.pad(gamma, (0, pad))
        beta = jnp.pad(beta, (0, pad))

    tn = _pick_tn(n_pad)
    tk = _pick_tk(F)
    assert n_pad % tn == 0 and F % tk == 0

    # bf16 matmul operands; stats / accumulation stay f32 in the kernel.
    xq = x.astype(compute_dtype)
    wq = w_fn.astype(compute_dtype)
    b2 = b.reshape(1, n_pad).astype(jnp.float32)
    g2 = gamma.reshape(1, n_pad).astype(jnp.float32)
    beta2 = beta.reshape(1, n_pad).astype(jnp.float32)

    grid = (n_pad // tn, F // tk)        # K innermost (accumulator carried)

    x_spec = pl.BlockSpec((B, tk), lambda j, k: (0, k))
    w_spec = pl.BlockSpec((tk, tn), lambda j, k: (k, j))
    vec_spec = pl.BlockSpec((1, tn), lambda j, k: (0, j))
    out_spec = pl.BlockSpec((B, tn), lambda j, k: (0, j))

    cparams = pltpu.CompilerParams(
        dimension_semantics=("parallel", "arbitrary"),
        vmem_limit_bytes=32 * 1024 * 1024,   # explicit; fits v7x's 64 MiB VMEM
    )

    if fuse_bn:
        kernel = _linear_bn_kernel
        in_specs = [x_spec, w_spec, vec_spec, vec_spec]
        args = (xq, wq, g2, beta2)           # bias dropped: cancels under BN
    else:
        kernel = _linear_kernel
        in_specs = [x_spec, w_spec, vec_spec]
        args = (xq, wq, b2)

    out = pl.pallas_call(
        kernel,
        out_shape=jax.ShapeDtypeStruct((B, n_pad), x.dtype),
        grid_spec=pltpu.PrefetchScalarGridSpec(
            num_scalar_prefetch=0,
            grid=grid,
            in_specs=in_specs,
            out_specs=out_spec,
            scratch_shapes=[pltpu.VMEM((B, tn), jnp.float32)],
        ),
        compiler_params=cparams,
    )(*args)

    if n_pad != N:
        out = out[:, :N]
    return out


@functools.partial(jax.jit, static_argnames=("type", "compute_dtype"))
def feat_bottleneck_forward(x, params, type="ori", compute_dtype=jnp.bfloat16):
    return _feat_bottleneck_pallas(
        x, params["w_fn"], params["b"], params["gamma"], params["beta"],
        fuse_bn=(type == "bn"), compute_dtype=compute_dtype,
    )


# --------------------------- parameter construction -------------------------

def init_feat_bottleneck_params(key, feature_dim, bottleneck_dim=256,
                                dtype=jnp.float32):
    k_w, _ = jax.random.split(key)
    # nn.init.xavier_normal_ on Linear weight; bias zeros.
    # Stored PRE-TRANSPOSED as (feature_dim, bottleneck_dim) so the kernel does
    # a plain NN contraction (lane-dense weight tiles, no XLU relayout).
    std = (2.0 / (feature_dim + bottleneck_dim)) ** 0.5
    w_fn = std * jax.random.normal(k_w, (feature_dim, bottleneck_dim), dtype)
    b = jnp.zeros((bottleneck_dim,), dtype)
    # BatchNorm1d affine params: default init weight=1, bias=0
    # (init_weights is applied only to self.bottleneck in the PyTorch module).
    gamma = jnp.ones((bottleneck_dim,), dtype)
    beta = jnp.zeros((bottleneck_dim,), dtype)
    return {"w_fn": w_fn, "b": b, "gamma": gamma, "beta": beta}


# ---------------------------------- main -------------------------------------

if __name__ == "__main__":
    batch = 8
    feature_dim = 32
    bottleneck_dim = 256

    key = jax.random.PRNGKey(0)
    k_x, k_p, k_b = jax.random.split(key, 3)
    x = jax.random.normal(k_x, (batch, feature_dim), jnp.float32)
    params = init_feat_bottleneck_params(k_p, feature_dim, bottleneck_dim)
    # Non-zero bias (as after training) so the 'ori' bias-add path is exercised
    # and the BN-path bias cancellation is actually tested.
    params["b"] = 0.1 * jax.random.normal(k_b, (bottleneck_dim,), jnp.float32)

    # type='ori' (default): just the bottleneck Linear.
    y_ori = feat_bottleneck_forward(x, params, type="ori")
    jax.block_until_ready(y_ori)

    # type='bn': fused Linear + BatchNorm1d (training-mode batch stats).
    y_bn = feat_bottleneck_forward(x, params, type="bn")
    jax.block_until_ready(y_bn)

    # Reference matching the kernel's precision: bf16-rounded matmul operands,
    # all accumulation / BN statistics in f32.
    xq = x.astype(jnp.bfloat16).astype(jnp.float32)
    wq = params["w_fn"].astype(jnp.bfloat16).astype(jnp.float32)
    ref_lin = xq @ wq + params["b"]
    mean = ref_lin.mean(axis=0, keepdims=True)
    var = ((ref_lin - mean) ** 2).mean(axis=0, keepdims=True)
    ref_bn = (params["gamma"] * (ref_lin - mean) / jnp.sqrt(var + _BN_EPS)
              + params["beta"])

    assert jnp.allclose(y_ori, ref_lin, atol=2e-3, rtol=2e-3), \
        float(jnp.max(jnp.abs(y_ori - ref_lin)))
    assert jnp.allclose(y_bn, ref_bn, atol=5e-3, rtol=5e-3), \
        float(jnp.max(jnp.abs(y_bn - ref_bn)))

    print("KERNEL_OK")
</pallas_src>

<mosaic_0001>
module attributes {stable_mosaic.version = 11 : i64} {
  func.func @_linear_kernel(%arg0: i32, %arg1: i32, %arg2: memref<8x32xbf16, #tpu.memory_space<vmem>>, %arg3: memref<32x256xbf16, #tpu.memory_space<vmem>>, %arg4: memref<1x256xf32, #tpu.memory_space<vmem>>, %arg5: memref<8x256xf32, #tpu.memory_space<vmem>>, %arg6: memref<8x256xf32, #tpu.memory_space<vmem>>) attributes {dimension_semantics = [#tpu.dimension_semantics<parallel>, #tpu.dimension_semantics<arbitrary>], iteration_bounds = array<i64: 1, 1>, scalar_prefetch = 0 : i64, scratch_operands = 1 : i64, tpu.core_type = #tpu.core_type<tc>, window_params = [{transform_indices = @transform_0, window_bounds = array<i64: 8, 32>}, {transform_indices = @transform_1, window_bounds = array<i64: 32, 256>}, {transform_indices = @transform_2, window_bounds = array<i64: 1, 256>}, {transform_indices = @transform_3, window_bounds = array<i64: 8, 256>}]} {
    %c0_i32 = arith.constant 0 : i32
    %0 = arith.cmpi eq, %arg1, %c0_i32 : i32
    %1 = arith.extui %0 : i1 to i32
    %c0_i32_0 = arith.constant 0 : i32
    %2 = arith.cmpi ne, %1, %c0_i32_0 : i32
    scf.if %2 {
      %cst_10 = arith.constant 0.000000e+00 : f32
      %12 = vector.broadcast %cst_10 : f32 to vector<8x256xf32>
      %c0_11 = arith.constant 0 : index
      %c0_12 = arith.constant 0 : index
      %13 = vector.load %arg6[%c0_11, %c0_12] : memref<8x256xf32, #tpu.memory_space<vmem>>, vector<8x256xf32>
      tpu.vector_store %arg6[%c0_11, %c0_12], %12 {strides = array<i32>} : memref<8x256xf32, #tpu.memory_space<vmem>>, vector<8x256xf32>,
    } else {
    }
    %c0 = arith.constant 0 : index
    %c0_1 = arith.constant 0 : index
    %3 = vector.load %arg6[%c0, %c0_1] : memref<8x256xf32, #tpu.memory_space<vmem>>, vector<8x256xf32>
    %c0_2 = arith.constant 0 : index
    %c0_3 = arith.constant 0 : index
    %4 = vector.load %arg2[%c0_2, %c0_3] : memref<8x32xbf16, #tpu.memory_space<vmem>>, vector<8x32xbf16>
    %c0_4 = arith.constant 0 : index
    %c0_5 = arith.constant 0 : index
    %5 = vector.load %arg3[%c0_4, %c0_5] : memref<32x256xbf16, #tpu.memory_space<vmem>>, vector<32x256xbf16>
    %cst = arith.constant dense<0.000000e+00> : vector<8x256xf32>
    %6 = tpu.matmul %4, %5, %cst {dimension_numbers = #tpu.dot_dimension_numbers<[1], [0], [0], [1], [0, 0, 1, 1], [], []>} : vector<8x32xbf16>, vector<32x256xbf16>, vector<8x256xf32> -> vector<8x256xf32>
    %7 = arith.addf %3, %6 : vector<8x256xf32>
    %c0_6 = arith.constant 0 : index
    %c0_7 = arith.constant 0 : index
    %8 = vector.load %arg6[%c0_6, %c0_7] : memref<8x256xf32, #tpu.memory_space<vmem>>, vector<8x256xf32>
    tpu.vector_store %arg6[%c0_6, %c0_7], %7 {strides = array<i32>} : memref<8x256xf32, #tpu.memory_space<vmem>>, vector<8x256xf32>,
    %c0_i32_8 = arith.constant 0 : i32
    %9 = arith.cmpi eq, %arg1, %c0_i32_8 : i32
    %10 = arith.extui %9 : i1 to i32
    %c0_i32_9 = arith.constant 0 : i32
    %11 = arith.cmpi ne, %10, %c0_i32_9 : i32
    scf.if %11 {
      %c0_10 = arith.constant 0 : index
      %c0_11 = arith.constant 0 : index
      %12 = vector.load %arg6[%c0_10, %c0_11] : memref<8x256xf32, #tpu.memory_space<vmem>>, vector<8x256xf32>
      %c0_12 = arith.constant 0 : index
      %c0_13 = arith.constant 0 : index
      %13 = vector.load %arg4[%c0_12, %c0_13] : memref<1x256xf32, #tpu.memory_space<vmem>>, vector<1x256xf32>
      %14 = vector.broadcast %13 : vector<1x256xf32> to vector<8x256xf32>
      %15 = arith.addf %12, %14 : vector<8x256xf32>
      %c0_14 = arith.constant 0 : index
      %c0_15 = arith.constant 0 : index
      %16 = vector.load %arg5[%c0_14, %c0_15] : memref<8x256xf32, #tpu.memory_space<vmem>>, vector<8x256xf32>
      tpu.vector_store %arg5[%c0_14, %c0_15], %15 {strides = array<i32>} : memref<8x256xf32, #tpu.memory_space<vmem>>, vector<8x256xf32>,
    } else {
    }
    return
  }
  func.func @transform_0(%arg0: i32, %arg1: i32) -> (i32, i32) {
    %c0_i32 = arith.constant 0 : i32
    %c0_i32_0 = arith.constant 0 : i32
    return %c0_i32, %arg1 : i32, i32
  }
  func.func @transform_1(%arg0: i32, %arg1: i32) -> (i32, i32) {
    %c0_i32 = arith.constant 0 : i32
    return %arg1, %arg0 : i32, i32
  }
  func.func @transform_2(%arg0: i32, %arg1: i32) -> (i32, i32) {
    %c0_i32 = arith.constant 0 : i32
    %c0_i32_0 = arith.constant 0 : i32
    return %c0_i32, %arg0 : i32, i32
  }
  func.func @transform_3(%arg0: i32, %arg1: i32) -> (i32, i32) {
    %c0_i32 = arith.constant 0 : i32
    %c0_i32_0 = arith.constant 0 : i32
    return %c0_i32, %arg0 : i32, i32
  }
}

</mosaic_0001>

<llo_original>
// kernel: feat_bottleneck_forward.1
$region0: #{feat_bottleneck_forward.1}
  #allocation0 [shape = 'u32[]', space=smem, size = 0x4, offset = 0x4, fixed_abs, tag = 'smem constant byte address 0x4 - core index']
  #allocation1 [shape = 'u32[144,128]{1,0:T(1,128)}', space=vmem, size = 0x12000, scoped, tag = 'internal scratch']
  #allocation2 [shape = 'f32[8,256]{1,0:T(8,128)}', space=vmem, size = 0x2000, scoped, tag = 'scratch operand']
  %s0 = inlined_call_operand.vmem [shape: bf16[8,32], index: 0, kind: input, shape index: {}]
  %s1 = inlined_call_operand.vmem [shape: bf16[32,256], index: 1, kind: input, shape index: {}]
  %s2 = inlined_call_operand.vmem [shape: f32[1,256], index: 2, kind: input, shape index: {}]
  %s3 = inlined_call_operand.hbm [shape: f32[8,256], index: 3, kind: output, shape index: {}]
  %s4 = sld [smem:[#allocation0]]
  $region30: #{feat_bottleneck_forward.1} parent=0
    _
  %s6 = ssub.s32 1, %s4
  %s7 = scalar_select 0, %s6, %s4
  $region1: #{feat_bottleneck_forward.1} parent=0
    #allocation3 [shape = 'u8[8192]{0}', space=vmem, size = 0x2000, scoped, tag = 'output window, operand 0, single buffered']
    #allocation4 [shape = 's32[1]{0}', space=sflag, size = 0x4, scoped, tag = 'scoped memory for feat_bottleneck_forward.1']
    %8 = vsyncpa [#allocation4], 0
    // Predicated region
    $region2: #{feat_bottleneck_forward.1} parent=1 // pred_check
      _
    $region3: #{feat_bottleneck_forward.1} parent=1 // pred_check_branch
      %10 = sbr.rel (0) target = $region5
    $region4: #{feat_bottleneck_forward.1} parent=1 // pred_region
      _
    $region5: #{feat_bottleneck_forward.1} parent=1 // pred_fallthru
      _
    // Predicated region
    $region6: #{feat_bottleneck_forward.1} parent=1 // pred_check
      _
    $region7: #{feat_bottleneck_forward.1} parent=1 // pred_check_branch
      %12 = sbr.rel (0) target = $region9
    $region8: #{feat_bottleneck_forward.1} parent=1 // pred_region
      _
    $region9: #{feat_bottleneck_forward.1} parent=1 // pred_fallthru
      _
    // Predicated region
    $region10: #{feat_bottleneck_forward.1} parent=1 // pred_check
      _
    $region11: #{feat_bottleneck_forward.1} parent=1 // pred_check_branch
      %14 = sbr.rel (0) target = $region13
    $region12: #{feat_bottleneck_forward.1} parent=1 // pred_region
      _
    $region13: #{feat_bottleneck_forward.1} parent=1 // pred_fallthru
      _
    %p16 = scmp.eq.s32.totalorder 0, 0
    // Predicated region
    $region14: #{feat_bottleneck_forward.1} parent=1 // pred_check
      %p17 = pneg %p16
    $region15: #{feat_bottleneck_forward.1} parent=1 // pred_check_branch
      %19 = sbr.rel (%p17) target = $region17
    $region16: #{feat_bottleneck_forward.1} parent=1 // pred_region
      %20 = vst [vmem:[#allocation2] sm:$0xff] 0.0
      %21 = vst [vmem:[#allocation2 + $0x8] sm:$0xff] 0.0
    $region17: #{feat_bottleneck_forward.1} parent=1 // pred_fallthru
      _
    %v22 = vld [vmem:[#allocation2] sm:$0xff]
    %v23 = vld [vmem:[#allocation2 + $0x8] sm:$0xff]
    %v24 = vld [vmem:[%s0] sm:$0xf]
    %v25 = vld [vmem:[%s1] sm:$0xff]
    %v26 = vld [vmem:[%s1 + $0x8] sm:$0xff]
    %v27 = vld [vmem:[%s1 + $0x10] sm:$0xff]
    %v28 = vld [vmem:[%s1 + $0x18] sm:$0xff]
    %v33 = vunpack.c.l.b16 %v25
    %v34 = vunpack.c.h.b16 %v25
    %v35 = vunpack.c.l.b16 %v26
    %v36 = vunpack.c.h.b16 %v26
    %v37 = vunpack.c.l.b16 %v27
    %v38 = vunpack.c.h.b16 %v27
    %v39 = vunpack.c.l.b16 %v28
    %v40 = vunpack.c.h.b16 %v28
    %v41 = vpack.c.b16 %v35, %v33
    %v42 = vpack.c.b16 %v36, %v34
    %v43 = vpack.c.b16 %v39, %v37
    %v44 = vpack.c.b16 %v40, %v38
    %vm49 = vcmask 261120
    %v51 = vsel %vm49, %v24, 0
    %53 = vmatprep.subr.bf16.mxu0 %v42
    %54 = vmatpush1.bf16.msra.mxu0 %v41
    %55 = vmatprep.subr.bf16.mxu0 %v44
    %56 = vmatpush1.bf16.msra.mxu0 %v43
    %57 = vmatprep.subr.bf16.mxu0 0
    %58 = vmatpush1.bf16.msra.mxu0 0
    %59 = vmatprep.subr.bf16.mxu0 0
    %60 = vmatpush1.bf16.msra.mxu0 0
    %61 = vmatprep.subr.bf16.mxu0 0
    %62 = vmatpush1.bf16.msra.mxu0 0
    %63 = vmatprep.subr.bf16.mxu0 0
    %64 = vmatpush1.bf16.msra.mxu0 0
    %65 = vmatprep.subr.bf16.mxu0 0
    %66 = vmatpush1.bf16.msra.mxu0 0
    %67 = vmatprep.subr.bf16.mxu0 0
    %68 = vmatpush1.bf16.msra.mxu0 0
    %69 = vmatprep.subr.bf16.mxu0 0
    %70 = vmatpush1.bf16.msra.mxu0 0
    %71 = vmatprep.subr.bf16.mxu0 0
    %72 = vmatpush1.bf16.msra.mxu0 0
    %73 = vmatprep.subr.bf16.mxu0 0
    %74 = vmatpush1.bf16.msra.mxu0 0
    %75 = vmatprep.subr.bf16.mxu0 0
    %76 = vmatpush1.bf16.msra.mxu0 0
    %77 = vmatprep.subr.bf16.mxu0 0
    %78 = vmatpush1.bf16.msra.mxu0 0
    %79 = vmatprep.subr.bf16.mxu0 0
    %80 = vmatpush1.bf16.msra.mxu0 0
    %81 = vmatprep.subr.bf16.mxu0 0
    %82 = vmatpush1.bf16.msra.mxu0 0
    %83 = vmatprep.subr.bf16.mxu0 0
    %84 = vmatpush1.bf16.msra.mxu0 0
    %85 = vmatprep.mubr.bf16.mxu0 0
    %86 = vmatmul.mubr.bf16.gmra.mrb[0].mxu0 %v51
    %v87 = vpop.f32.mrb[0].mxu0
    %v88 = vadd.f32 0.0, %v87
    %v89 = vpop.f32.mrb[0].mxu0
    %v90 = vadd.f32 0.0, %v89
    %v91 = vpop.f32.mrb[0].mxu0
    %v92 = vpop.f32.mrb[0].mxu0
    %93 = vdwg.mxu0
    %v94 = vadd.f32 %v22, %v88
    %v95 = vadd.f32 %v23, %v90
    %96 = vst [vmem:[#allocation2] sm:$0xff] %v94
    %97 = vst [vmem:[#allocation2 + $0x8] sm:$0xff] %v95
    // Predicated region
    $region18: #{feat_bottleneck_forward.1} parent=1 // pred_check
      %p98 = pneg %p16
    $region19: #{feat_bottleneck_forward.1} parent=1 // pred_check_branch
      %100 = sbr.rel (%p98) target = $region21
    $region20: #{feat_bottleneck_forward.1} parent=1 // pred_region
      %v101 = vld [vmem:[#allocation2] sm:$0xff]
      %v102 = vld [vmem:[#allocation2 + $0x8] sm:$0xff]
      %v103 = vld [vmem:[%s2] sm:$0x3]
      %v105 = vlaneseq
      %v106 = vshrl.u32 %v105, 7
      %v107 = vsub.s32 0, %v106
      %v108 = vrot.slane %v103, %v107
      %v109 = vlaneseq
      %v110 = vshrl.u32 %v109, 7
      %v111 = vsub.s32 1, %v110
      %v112 = vrot.slane %v103, %v111
      %v115 = vadd.f32 %v101, %v108
      %v116 = vadd.f32 %v102, %v112
      %117 = vst [vmem:[#allocation3] sm:$0xff] %v115
      %118 = vst [vmem:[#allocation3 + $0x8] sm:$0xff] %v116
    $region21: #{feat_bottleneck_forward.1} parent=1 // pred_fallthru
      _
    // Predicated region
    $region22: #{feat_bottleneck_forward.1} parent=1 // pred_check
      _
    $region23: #{feat_bottleneck_forward.1} parent=1 // pred_check_branch
      %120 = sbr.rel (0) target = $region25
    $region24: #{feat_bottleneck_forward.1} parent=1 // pred_region
      %s122 = ssub.s32 256, 256
      %123 = vsyncadd [#allocation4], %s122
      %s125 = sshll.u32 [#allocation3], 4
      %s126 = int_to_ptr.vmem [resolvable:$true] %s125
      %128 = dma.vmem_to_hbm [thread:$0]  %s126, 256, %s3, [#allocation4]
    $region25: #{feat_bottleneck_forward.1} parent=1 // pred_fallthru
      _
    // Predicated region
    $region26: #{feat_bottleneck_forward.1} parent=1 // pred_check
      _
    $region27: #{feat_bottleneck_forward.1} parent=1 // pred_check_branch
      %130 = sbr.rel (0) target = $region29
    $region28: #{feat_bottleneck_forward.1} parent=1 // pred_region
      %131 = dma.done [#allocation4], 256
    $region29: #{feat_bottleneck_forward.1} parent=1 // pred_fallthru
      _
    %132 = vsyncpa [#allocation4], 1

</llo_original>
